<compile_context>
chip_gen: v6e
topology: v6e:2x2x1
jax: 0.10.0
libtpu: 0.0.40
codegen_flags: <defaults>
</compile_context>

<pallas_src>
import numpy as np
import jax
import jax.numpy as jnp
from jax.experimental import pallas as pl
from jax.experimental.pallas import tpu as pltpu

NHID = 32                  # nhid
HP = 128                   # lane-padded feature width (multiple of 128)
POOLS = ["add"]            # pools
P = len(POOLS)             # second_nhid = P * NHID
MLP_NUM_LAYERS = 2
NUM_BIPARTITES = 2
HALF_STEP = False

TM_MAX = 256               # max rows (dst nodes) per tile
TK_MAX = 1024              # max cols (src nodes) per tile  (multiple of 128)


def _round_up(x, m):
    return ((x + m - 1) // m) * m


def _tiles(M, Ns):
    """Pick tile sizes / padded sizes so every BlockSpec dim is legal on TPU."""
    tm = min(TM_MAX, _round_up(max(M, 1), 16))    # 16: safe sublane alignment for bf16 A
    tk = min(TK_MAX, _round_up(max(Ns, 1), 8))
    Mp = _round_up(max(M, 1), tm)
    Np = _round_up(max(Ns, 1), tk)
    return tm, tk, Mp, Np


def _pad_rows(x, target):
    return jnp.pad(x, ((0, target - x.shape[0]), (0, 0)))


# ----------------------------------------------------------------------------
# Fused SelfCombiner kernel (tiled):
#   agg  = A @ x_src                 accumulated over the Ns (k) grid axis
#   h    = ReLU(ReLU(agg @ W1 + b1) @ W2 + b2)          (nn1: 2-layer MLP)
#   out  = ReLU(concat([x_self, h]) @ Wc + bc)          (combine: 1-layer MLP)
# ----------------------------------------------------------------------------
def self_combiner_kernel(xself_ref, xsrc_ref, a_ref,
                         w1_ref, b1_ref, w2_ref, b2_ref,
                         wc_ref, bc_ref, out_ref, acc_ref):
    f32 = jnp.float32
    k = pl.program_id(1)

    @pl.when(k == 0)
    def _():
        acc_ref[...] = jnp.zeros_like(acc_ref)

    # scatter-add ('add' pool) as dense adjacency matmul; A streamed as bf16 (exact
    # small-int edge counts), accumulated in f32.
    acc_ref[...] += jnp.dot(a_ref[...].astype(f32), xsrc_ref[...],
                            preferred_element_type=f32)

    @pl.when(k == pl.num_programs(1) - 1)
    def _():
        agg = acc_ref[...]
        h = jnp.maximum(jnp.dot(agg, w1_ref[...], preferred_element_type=f32)
                        + b1_ref[...], 0.0)
        h = jnp.maximum(jnp.dot(h, w2_ref[...], preferred_element_type=f32)
                        + b2_ref[...], 0.0)
        xh = jnp.concatenate([xself_ref[...], h], axis=-1)          # (tm, 2*HP)
        o = jnp.dot(xh, wc_ref[...], preferred_element_type=f32) + bc_ref[...]
        out_ref[...] = jnp.maximum(o, 0.0)


def self_combiner(x_self_p, x_src_p, A_dev, M, tm, tk, p):
    """x_self_p: [Mp, HP] f32, x_src_p: [Np, HP] f32, A_dev: [Mp, Np] bf16.
    Returns [M, HP] (pad lanes stay zero)."""
    Mp, _ = x_self_p.shape
    Np = x_src_p.shape[0]
    grid = (Mp // tm, Np // tk)

    out = pl.pallas_call(
        self_combiner_kernel,
        out_shape=jax.ShapeDtypeStruct((Mp, HP), jnp.float32),
        grid_spec=pltpu.PrefetchScalarGridSpec(
            num_scalar_prefetch=0,
            grid=grid,
            in_specs=[
                pl.BlockSpec((tm, HP), lambda i, k: (i, 0)),        # x_self
                pl.BlockSpec((tk, HP), lambda i, k: (k, 0)),        # x_src
                pl.BlockSpec((tm, tk), lambda i, k: (i, k)),        # A (bf16)
                pl.BlockSpec((HP, HP), lambda i, k: (0, 0)),        # w1
                pl.BlockSpec((1, HP), lambda i, k: (0, 0)),         # b1
                pl.BlockSpec((HP, HP), lambda i, k: (0, 0)),        # w2
                pl.BlockSpec((1, HP), lambda i, k: (0, 0)),         # b2
                pl.BlockSpec((2 * HP, HP), lambda i, k: (0, 0)),    # wc (merged combine)
                pl.BlockSpec((1, HP), lambda i, k: (0, 0)),         # bc
            ],
            out_specs=pl.BlockSpec((tm, HP), lambda i, k: (i, 0)),
            scratch_shapes=[pltpu.VMEM((tm, HP), jnp.float32)],
        ),
        compiler_params=pltpu.CompilerParams(
            dimension_semantics=("parallel", "arbitrary"),
            vmem_limit_bytes=32 * 1024 * 1024,
        ),
    )(x_self_p, x_src_p, A_dev,
      p["w1"], p["b1"], p["w2"], p["b2"], p["wc"], p["bc"])
    return out[:M]


# ----------------------------------------------------------------------------
# Parameter init (deterministic, synthetic) + lane padding
# ----------------------------------------------------------------------------
def init_self_combiner(key, nhid, second_nhid):
    ks = jax.random.split(key, 4)
    s = 0.15
    return dict(
        w1=jax.random.normal(ks[0], (second_nhid, nhid), jnp.float32) * s,
        b1=jnp.full((1, nhid), 0.01, jnp.float32),
        w2=jax.random.normal(ks[1], (nhid, nhid), jnp.float32) * s,
        b2=jnp.full((1, nhid), 0.01, jnp.float32),
        wc_x=jax.random.normal(ks[2], (nhid, nhid), jnp.float32) * s,
        wc_h=jax.random.normal(ks[3], (nhid, nhid), jnp.float32) * s,
        bc=jnp.full((1, nhid), 0.01, jnp.float32),
    )


def init_sequential_layer(key, nhid, num_bipartites, pools):
    second_nhid = len(pools) * nhid
    keys = jax.random.split(key, 2 * num_bipartites)
    return dict(
        combine1=[init_self_combiner(keys[i], nhid, second_nhid)
                  for i in range(num_bipartites)],
        combine2=[init_self_combiner(keys[num_bipartites + i], nhid, second_nhid)
                  for i in range(num_bipartites)],
    )


def _pad_mat(w, r, c):
    out = jnp.zeros((r, c), jnp.float32)
    return out.at[:w.shape[0], :w.shape[1]].set(w)


def pad_self_combiner(p, H, HP_):
    wc = jnp.zeros((2 * HP_, HP_), jnp.float32)
    wc = wc.at[:H, :H].set(p["wc_x"])             # rows for x_self lanes
    wc = wc.at[HP_:HP_ + H, :H].set(p["wc_h"])    # rows for h lanes
    return dict(
        w1=_pad_mat(p["w1"], HP_, HP_), b1=_pad_mat(p["b1"], 1, HP_),
        w2=_pad_mat(p["w2"], HP_, HP_), b2=_pad_mat(p["b2"], 1, HP_),
        wc=wc, bc=_pad_mat(p["bc"], 1, HP_),
    )


def pad_sequential_params(params, H, HP_):
    return dict(
        combine1=[pad_self_combiner(p, H, HP_) for p in params["combine1"]],
        combine2=[pad_self_combiner(p, H, HP_) for p in params["combine2"]],
    )


# ----------------------------------------------------------------------------
# One-time graph preprocessing (host): level permutation + padded bf16 adjacencies
# ----------------------------------------------------------------------------
def prepare_graph(k_batch, bipartites_list):
    k_batch = np.asarray(k_batch)
    L = len(bipartites_list)
    level_idx = [np.nonzero(k_batch == i)[0] for i in range(L + 1)]
    sizes = [int(len(ix)) for ix in level_idx]
    perm = np.concatenate(level_idx).astype(np.int32)
    inv_perm = np.empty_like(perm)
    inv_perm[perm] = np.arange(perm.size, dtype=np.int32)
    offsets = [0]
    for s in sizes:
        offsets.append(offsets[-1] + s)

    def build(M, Ns, rows, cols):
        tm, tk, Mp, Np = _tiles(M, Ns)
        A = np.zeros((Mp, Np), np.float32)
        if M > 0 and Ns > 0:
            np.add.at(A, (rows, cols), 1.0)
        assert A.max() <= 256.0, "edge multiplicity too large for exact bf16 counts"
        return dict(A=jnp.asarray(A, jnp.bfloat16),
                    tm=tm, tk=tk, Mp=Mp, Np=Np, M=M, Ns=Ns)

    A1, A2 = [], []
    for i in range(L):
        ei = np.asarray(bipartites_list[i])
        M_left, M_right = sizes[i], sizes[i + 1]
        A1.append(build(M_left, M_right, ei[0], ei[1]))   # scatter right -> left
        A2.append(build(M_right, M_left, ei[1], ei[0]))   # scatter left  -> right
    return dict(L=L, sizes=sizes, offsets=offsets,
                perm=jnp.asarray(perm), inv_perm=jnp.asarray(inv_perm),
                A1=A1, A2=A2)


# ----------------------------------------------------------------------------
# SequentialLayer.forward
# ----------------------------------------------------------------------------
def sequential_layer_forward(xs, prepared, padded_params, half_step=False):
    N, H = xs.shape
    L = prepared["L"]
    offsets = prepared["offsets"]

    xs_sorted = xs[prepared["perm"]]
    xs_p = jnp.pad(xs_sorted, ((0, 0), (0, HP - H)))          # lane-pad 32 -> 128
    x_levels = [xs_p[offsets[i]:offsets[i + 1]] for i in range(L + 1)]  # static slices

    out_levels = list(x_levels)

    # ---- phase 1: right -> left ----
    x_right = x_levels[L]
    for i in reversed(range(L)):
        spec = prepared["A1"][i]
        if spec["M"] == 0:
            x_right = x_levels[i]
            continue
        x_new = self_combiner(
            _pad_rows(x_levels[i], spec["Mp"]),
            _pad_rows(x_right, spec["Np"]),
            spec["A"], spec["M"], spec["tm"], spec["tk"],
            padded_params["combine1"][i])
        out_levels[i] = x_new
        x_right = x_new

    # ---- phase 2: left -> right ----
    if not half_step:
        snap = list(out_levels)          # xs = xs_out.clone()
        x_left = snap[0]
        for i in range(L):
            spec = prepared["A2"][i]
            if spec["M"] == 0:
                x_left = snap[i + 1]
                continue
            x_new = self_combiner(
                _pad_rows(snap[i + 1], spec["Mp"]),
                _pad_rows(x_left, spec["Np"]),
                spec["A"], spec["M"], spec["tm"], spec["tk"],
                padded_params["combine2"][i])
            out_levels[i + 1] = x_new
            x_left = x_new

    xs_out_sorted = jnp.concatenate(out_levels, axis=0)[:, :H]
    return xs_out_sorted[prepared["inv_perm"]]


# ----------------------------------------------------------------------------
# Pure numpy reference (unpadded f32 math) for correctness
# ----------------------------------------------------------------------------
def _np_self_combiner(x_self, x_src, A, p):
    agg = A @ x_src
    h = np.maximum(agg @ np.asarray(p["w1"]) + np.asarray(p["b1"]), 0.0)
    h = np.maximum(h @ np.asarray(p["w2"]) + np.asarray(p["b2"]), 0.0)
    o = x_self @ np.asarray(p["wc_x"]) + h @ np.asarray(p["wc_h"]) + np.asarray(p["bc"])
    return np.maximum(o, 0.0)


def _np_reference(xs, k_batch, bipartites_list, params, half_step=False):
    xs = np.asarray(xs)
    L = len(bipartites_list)
    level_idx = [np.nonzero(k_batch == i)[0] for i in range(L + 1)]
    xs_out = xs.copy()
    x_right = xs[level_idx[L]]
    for i in reversed(range(L)):
        ei = bipartites_list[i]
        x_left = xs[level_idx[i]]
        A = np.zeros((x_left.shape[0], x_right.shape[0]), np.float32)
        np.add.at(A, (ei[0], ei[1]), 1.0)
        x_new = _np_self_combiner(x_left, x_right, A, params["combine1"][i])
        xs_out[level_idx[i]] = x_new
        x_right = x_new
    if not half_step:
        xs_snap = xs_out.copy()
        x_left = xs_snap[level_idx[0]]
        for i in range(L):
            ei = bipartites_list[i]
            x_right = xs_snap[level_idx[i + 1]]
            A = np.zeros((x_right.shape[0], x_left.shape[0]), np.float32)
            np.add.at(A, (ei[1], ei[0]), 1.0)
            x_new = _np_self_combiner(x_right, x_left, A, params["combine2"][i])
            xs_out[level_idx[i + 1]] = x_new
            x_left = x_new
    return xs_out


if __name__ == "__main__":
    key = jax.random.PRNGKey(0)
    k_params, k_x = jax.random.split(key)

    params = init_sequential_layer(k_params, NHID, NUM_BIPARTITES, POOLS)
    padded_params = pad_sequential_params(params, NHID, HP)

    # 3 levels of nodes: 8 (level 0), 6 (level 1), 4 (level 2)
    n0, n1, n2 = 8, 6, 4
    k_batch = np.array([0] * n0 + [1] * n1 + [2] * n2, dtype=np.int32)
    xs = jax.random.normal(k_x, (n0 + n1 + n2, NHID), jnp.float32)

    # bipartite 0: level0 <-> level1, 12 edges; bipartite 1: level1 <-> level2, 8 edges
    bip0 = np.stack([np.arange(12) % n0, (np.arange(12) * 3) % n1]).astype(np.int32)
    bip1 = np.stack([np.arange(8) % n1, (np.arange(8) * 5) % n2]).astype(np.int32)
    bipartites_list = [bip0, bip1]

    prepared = prepare_graph(k_batch, bipartites_list)   # one-time host preprocessing

    out = sequential_layer_forward(xs, prepared, padded_params, half_step=HALF_STEP)
    out = jax.block_until_ready(out)

    ref = _np_reference(xs, k_batch, bipartites_list, params, half_step=HALF_STEP)
    np.testing.assert_allclose(np.asarray(out), ref, rtol=2e-3, atol=2e-3)

    print("KERNEL_OK")
</pallas_src>

<mosaic_0001>
module attributes {stable_mosaic.version = 11 : i64} {
  func.func @self_combiner_kernel(%arg0: i32, %arg1: i32, %arg2: memref<16x128xf32, #tpu.memory_space<vmem>>, %arg3: memref<8x128xf32, #tpu.memory_space<vmem>>, %arg4: memref<16x8xbf16, #tpu.memory_space<vmem>>, %arg5: memref<128x128xf32, #tpu.memory_space<vmem>>, %arg6: memref<1x128xf32, #tpu.memory_space<vmem>>, %arg7: memref<128x128xf32, #tpu.memory_space<vmem>>, %arg8: memref<1x128xf32, #tpu.memory_space<vmem>>, %arg9: memref<256x128xf32, #tpu.memory_space<vmem>>, %arg10: memref<1x128xf32, #tpu.memory_space<vmem>>, %arg11: memref<16x128xf32, #tpu.memory_space<vmem>>, %arg12: memref<16x128xf32, #tpu.memory_space<vmem>>) attributes {dimension_semantics = [#tpu.dimension_semantics<parallel>, #tpu.dimension_semantics<arbitrary>], iteration_bounds = array<i64: 1, 1>, scalar_prefetch = 0 : i64, scratch_operands = 1 : i64, tpu.core_type = #tpu.core_type<tc>, window_params = [{transform_indices = @transform_0, window_bounds = array<i64: 16, 128>}, {transform_indices = @transform_1, window_bounds = array<i64: 8, 128>}, {transform_indices = @transform_2, window_bounds = array<i64: 16, 8>}, {pipeline_mode = #tpu.pipeline_mode<synchronous>, transform_indices = @transform_3, window_bounds = array<i64: 128, 128>}, {pipeline_mode = #tpu.pipeline_mode<synchronous>, transform_indices = @transform_4, window_bounds = array<i64: 1, 128>}, {pipeline_mode = #tpu.pipeline_mode<synchronous>, transform_indices = @transform_5, window_bounds = array<i64: 128, 128>}, {pipeline_mode = #tpu.pipeline_mode<synchronous>, transform_indices = @transform_6, window_bounds = array<i64: 1, 128>}, {pipeline_mode = #tpu.pipeline_mode<synchronous>, transform_indices = @transform_7, window_bounds = array<i64: 256, 128>}, {pipeline_mode = #tpu.pipeline_mode<synchronous>, transform_indices = @transform_8, window_bounds = array<i64: 1, 128>}, {transform_indices = @transform_9, window_bounds = array<i64: 16, 128>}]} {
    %c0_i32 = arith.constant 0 : i32
    %0 = arith.cmpi eq, %arg1, %c0_i32 : i32
    %1 = arith.extui %0 : i1 to i32
    %c0_i32_0 = arith.constant 0 : i32
    %2 = arith.cmpi ne, %1, %c0_i32_0 : i32
    scf.if %2 {
      %cst_10 = arith.constant 0.000000e+00 : f32
      %13 = vector.broadcast %cst_10 : f32 to vector<16x128xf32>
      %c0_11 = arith.constant 0 : index
      %c0_12 = arith.constant 0 : index
      %14 = vector.load %arg12[%c0_11, %c0_12] : memref<16x128xf32, #tpu.memory_space<vmem>>, vector<16x128xf32>
      tpu.vector_store %arg12[%c0_11, %c0_12], %13 {strides = array<i32>} : memref<16x128xf32, #tpu.memory_space<vmem>>, vector<16x128xf32>,
    } else {
    }
    %c0 = arith.constant 0 : index
    %c0_1 = arith.constant 0 : index
    %3 = vector.load %arg12[%c0, %c0_1] : memref<16x128xf32, #tpu.memory_space<vmem>>, vector<16x128xf32>
    %c0_2 = arith.constant 0 : index
    %c0_3 = arith.constant 0 : index
    %4 = vector.load %arg4[%c0_2, %c0_3] : memref<16x8xbf16, #tpu.memory_space<vmem>>, vector<16x8xbf16>
    %5 = arith.extf %4 : vector<16x8xbf16> to vector<16x8xf32>
    %c0_4 = arith.constant 0 : index
    %c0_5 = arith.constant 0 : index
    %6 = vector.load %arg3[%c0_4, %c0_5] : memref<8x128xf32, #tpu.memory_space<vmem>>, vector<8x128xf32>
    %cst = arith.constant dense<0.000000e+00> : vector<16x128xf32>
    %7 = tpu.matmul %5, %6, %cst {dimension_numbers = #tpu.dot_dimension_numbers<[1], [0], [0], [1], [0, 0, 1, 1], [], []>} : vector<16x8xf32>, vector<8x128xf32>, vector<16x128xf32> -> vector<16x128xf32>
    %8 = arith.addf %3, %7 : vector<16x128xf32>
    %c0_6 = arith.constant 0 : index
    %c0_7 = arith.constant 0 : index
    %9 = vector.load %arg12[%c0_6, %c0_7] : memref<16x128xf32, #tpu.memory_space<vmem>>, vector<16x128xf32>
    tpu.vector_store %arg12[%c0_6, %c0_7], %8 {strides = array<i32>} : memref<16x128xf32, #tpu.memory_space<vmem>>, vector<16x128xf32>,
    %c0_i32_8 = arith.constant 0 : i32
    %10 = arith.cmpi eq, %arg1, %c0_i32_8 : i32
    %11 = arith.extui %10 : i1 to i32
    %c0_i32_9 = arith.constant 0 : i32
    %12 = arith.cmpi ne, %11, %c0_i32_9 : i32
    scf.if %12 {
      %c0_10 = arith.constant 0 : index
      %c0_11 = arith.constant 0 : index
      %13 = vector.load %arg12[%c0_10, %c0_11] : memref<16x128xf32, #tpu.memory_space<vmem>>, vector<16x128xf32>
      %c0_12 = arith.constant 0 : index
      %c0_13 = arith.constant 0 : index
      %14 = vector.load %arg5[%c0_12, %c0_13] : memref<128x128xf32, #tpu.memory_space<vmem>>, vector<128x128xf32>
      %cst_14 = arith.constant dense<0.000000e+00> : vector<16x128xf32>
      %15 = tpu.matmul %13, %14, %cst_14 {dimension_numbers = #tpu.dot_dimension_numbers<[1], [0], [0], [1], [0, 0, 1, 1], [], []>} : vector<16x128xf32>, vector<128x128xf32>, vector<16x128xf32> -> vector<16x128xf32>
      %c0_15 = arith.constant 0 : index
      %c0_16 = arith.constant 0 : index
      %16 = vector.load %arg6[%c0_15, %c0_16] : memref<1x128xf32, #tpu.memory_space<vmem>>, vector<1x128xf32>
      %17 = vector.broadcast %16 : vector<1x128xf32> to vector<16x128xf32>
      %18 = arith.addf %15, %17 : vector<16x128xf32>
      %cst_17 = arith.constant 0.000000e+00 : f32
      %19 = vector.broadcast %cst_17 : f32 to vector<16x128xf32>
      %20 = arith.maximumf %18, %19 : vector<16x128xf32>
      %c0_18 = arith.constant 0 : index
      %c0_19 = arith.constant 0 : index
      %21 = vector.load %arg7[%c0_18, %c0_19] : memref<128x128xf32, #tpu.memory_space<vmem>>, vector<128x128xf32>
      %cst_20 = arith.constant dense<0.000000e+00> : vector<16x128xf32>
      %22 = tpu.matmul %20, %21, %cst_20 {dimension_numbers = #tpu.dot_dimension_numbers<[1], [0], [0], [1], [0, 0, 1, 1], [], []>} : vector<16x128xf32>, vector<128x128xf32>, vector<16x128xf32> -> vector<16x128xf32>
      %c0_21 = arith.constant 0 : index
      %c0_22 = arith.constant 0 : index
      %23 = vector.load %arg8[%c0_21, %c0_22] : memref<1x128xf32, #tpu.memory_space<vmem>>, vector<1x128xf32>
      %24 = vector.broadcast %23 : vector<1x128xf32> to vector<16x128xf32>
      %25 = arith.addf %22, %24 : vector<16x128xf32>
      %cst_23 = arith.constant 0.000000e+00 : f32
      %26 = vector.broadcast %cst_23 : f32 to vector<16x128xf32>
      %27 = arith.maximumf %25, %26 : vector<16x128xf32>
      %c0_24 = arith.constant 0 : index
      %c0_25 = arith.constant 0 : index
      %28 = vector.load %arg2[%c0_24, %c0_25] : memref<16x128xf32, #tpu.memory_space<vmem>>, vector<16x128xf32>
      %29 = tpu.concatenate %28, %27 in 1 : vector<16x128xf32>, vector<16x128xf32> -> vector<16x256xf32>
      %c0_26 = arith.constant 0 : index
      %c0_27 = arith.constant 0 : index
      %30 = vector.load %arg9[%c0_26, %c0_27] : memref<256x128xf32, #tpu.memory_space<vmem>>, vector<256x128xf32>
      %cst_28 = arith.constant dense<0.000000e+00> : vector<16x128xf32>
      %31 = tpu.matmul %29, %30, %cst_28 {dimension_numbers = #tpu.dot_dimension_numbers<[1], [0], [0], [1], [0, 0, 1, 1], [], []>} : vector<16x256xf32>, vector<256x128xf32>, vector<16x128xf32> -> vector<16x128xf32>
      %c0_29 = arith.constant 0 : index
      %c0_30 = arith.constant 0 : index
      %32 = vector.load %arg10[%c0_29, %c0_30] : memref<1x128xf32, #tpu.memory_space<vmem>>, vector<1x128xf32>
      %33 = vector.broadcast %32 : vector<1x128xf32> to vector<16x128xf32>
      %34 = arith.addf %31, %33 : vector<16x128xf32>
      %cst_31 = arith.constant 0.000000e+00 : f32
      %35 = vector.broadcast %cst_31 : f32 to vector<16x128xf32>
      %36 = arith.maximumf %34, %35 : vector<16x128xf32>
      %c0_32 = arith.constant 0 : index
      %c0_33 = arith.constant 0 : index
      %37 = vector.load %arg11[%c0_32, %c0_33] : memref<16x128xf32, #tpu.memory_space<vmem>>, vector<16x128xf32>
      tpu.vector_store %arg11[%c0_32, %c0_33], %36 {strides = array<i32>} : memref<16x128xf32, #tpu.memory_space<vmem>>, vector<16x128xf32>,
    } else {
    }
    return
  }
  func.func @transform_0(%arg0: i32, %arg1: i32) -> (i32, i32) {
    %c0_i32 = arith.constant 0 : i32
    %c0_i32_0 = arith.constant 0 : i32
    return %arg0, %c0_i32 : i32, i32
  }
  func.func @transform_1(%arg0: i32, %arg1: i32) -> (i32, i32) {
    %c0_i32 = arith.constant 0 : i32
    %c0_i32_0 = arith.constant 0 : i32
    return %arg1, %c0_i32 : i32, i32
  }
  func.func @transform_2(%arg0: i32, %arg1: i32) -> (i32, i32) {
    %c0_i32 = arith.constant 0 : i32
    return %arg0, %arg1 : i32, i32
  }
  func.func @transform_3(%arg0: i32, %arg1: i32) -> (i32, i32) {
    %c0_i32 = arith.constant 0 : i32
    %c0_i32_0 = arith.constant 0 : i32
    %c0_i32_1 = arith.constant 0 : i32
    return %c0_i32, %c0_i32_0 : i32, i32
  }
  func.func @transform_4(%arg0: i32, %arg1: i32) -> (i32, i32) {
    %c0_i32 = arith.constant 0 : i32
    %c0_i32_0 = arith.constant 0 : i32
    %c0_i32_1 = arith.constant 0 : i32
    return %c0_i32, %c0_i32_0 : i32, i32
  }
  func.func @transform_5(%arg0: i32, %arg1: i32) -> (i32, i32) {
    %c0_i32 = arith.constant 0 : i32
    %c0_i32_0 = arith.constant 0 : i32
    %c0_i32_1 = arith.constant 0 : i32
    return %c0_i32, %c0_i32_0 : i32, i32
  }
  func.func @transform_6(%arg0: i32, %arg1: i32) -> (i32, i32) {
    %c0_i32 = arith.constant 0 : i32
    %c0_i32_0 = arith.constant 0 : i32
    %c0_i32_1 = arith.constant 0 : i32
    return %c0_i32, %c0_i32_0 : i32, i32
  }
  func.func @transform_7(%arg0: i32, %arg1: i32) -> (i32, i32) {
    %c0_i32 = arith.constant 0 : i32
    %c0_i32_0 = arith.constant 0 : i32
    %c0_i32_1 = arith.constant 0 : i32
    return %c0_i32, %c0_i32_0 : i32, i32
  }
  func.func @transform_8(%arg0: i32, %arg1: i32) -> (i32, i32) {
    %c0_i32 = arith.constant 0 : i32
    %c0_i32_0 = arith.constant 0 : i32
    %c0_i32_1 = arith.constant 0 : i32
    return %c0_i32, %c0_i32_0 : i32, i32
  }
  func.func @transform_9(%arg0: i32, %arg1: i32) -> (i32, i32) {
    %c0_i32 = arith.constant 0 : i32
    %c0_i32_0 = arith.constant 0 : i32
    return %arg0, %c0_i32 : i32, i32
  }
}

</mosaic_0001>

<llo_original>
// kernel: tpu_custom_call.1
$region0: #{tpu_custom_call.1}
  #allocation0 [shape = 'u32[]', space=smem, size = 0x4, offset = 0x4, fixed_abs, tag = 'smem constant byte address 0x4 - core index']
  #allocation1 [shape = 'u32[144,128]{1,0:T(1,128)}', space=vmem, size = 0x12000, scoped, tag = 'internal scratch']
  #allocation2 [shape = 'f32[16,128]{1,0:T(8,128)}', space=vmem, size = 0x2000, scoped, tag = 'scratch operand']
  %s0 = inlined_call_operand.hbm [shape: f32[16,128], index: 0, kind: input, shape index: {}]
  %s1 = inlined_call_operand.vmem [shape: f32[8,128], index: 1, kind: input, shape index: {}]
  %s2 = inlined_call_operand.vmem [shape: bf16[16,8], index: 2, kind: input, shape index: {}]
  %s3 = inlined_call_operand.hbm [shape: f32[128,128], index: 3, kind: input, shape index: {}]
  %s4 = inlined_call_operand.vmem [shape: f32[1,128], index: 4, kind: input, shape index: {}]
  %s5 = inlined_call_operand.hbm [shape: f32[128,128], index: 5, kind: input, shape index: {}]
  %s6 = inlined_call_operand.vmem [shape: f32[1,128], index: 6, kind: input, shape index: {}]
  %s7 = inlined_call_operand.hbm [shape: f32[256,128], index: 7, kind: input, shape index: {}]
  %s8 = inlined_call_operand.vmem [shape: f32[1,128], index: 8, kind: input, shape index: {}]
  %s9 = inlined_call_operand.hbm [shape: f32[16,128], index: 9, kind: output, shape index: {}]
  %s10 = sld [smem:[#allocation0]]
  $region70: #{tpu_custom_call.1} parent=0
    _
  %s12 = ssub.s32 1, %s10
  %s13 = scalar_select 0, %s12, %s10
  $region1: #{tpu_custom_call.1} parent=0
    #allocation3 [shape = 'u8[8192]{0}', space=vmem, size = 0x2000, scoped, tag = 'input window, operand 0, single buffered']
    #allocation4 [shape = 's32[1]{0}', space=sflag, size = 0x4, scoped, tag = 'scoped memory for tpu_custom_call.1']
    #allocation5 [shape = 's32[1]{0}', space=sflag, size = 0x4, scoped, tag = 'scoped memory for tpu_custom_call.1']
    #allocation6 [shape = 'u8[65536]{0}', space=vmem, size = 0x10000, scoped, tag = 'input window, operand 3, single buffered']
    #allocation7 [shape = 's32[1]{0}', space=sflag, size = 0x4, scoped, tag = 'scoped memory for tpu_custom_call.1']
    #allocation8 [shape = 'u8[65536]{0}', space=vmem, size = 0x10000, scoped, tag = 'input window, operand 5, single buffered']
    #allocation9 [shape = 'u8[131072]{0}', space=vmem, size = 0x20000, scoped, tag = 'input window, operand 7, single buffered']
    #allocation10 [shape = 's32[1]{0}', space=sflag, size = 0x4, scoped, tag = 'scoped memory for tpu_custom_call.1']
    #allocation11 [shape = 'u8[8192]{0}', space=vmem, size = 0x2000, scoped, tag = 'output window, operand 0, single buffered']
    %14 = vsyncpa [#allocation4], 0
    %15 = vsyncpa [#allocation7], 0
    %16 = vsyncpa [#allocation10], 0
    %17 = vsyncpa [#allocation5], 0
    // Predicated region
    $region2: #{tpu_custom_call.1} parent=1 // pred_check
      _
    $region3: #{tpu_custom_call.1} parent=1 // pred_check_branch
      %19 = sbr.rel (0) target = $region5
    $region4: #{tpu_custom_call.1} parent=1 // pred_region
      %s21 = ssub.s32 256, 256
      %22 = vsyncadd [#allocation4], %s21
      %s23 = sshll.u32 [#allocation3], 4
      %s24 = int_to_ptr.vmem [resolvable:$true] %s23
      %29 = dma.hbm_to_vmem [thread:$0]  %s0, 256, %s24, [#allocation4], 128, 128, 8
    $region5: #{tpu_custom_call.1} parent=1 // pred_fallthru
      _
    // Predicated region
    $region6: #{tpu_custom_call.1} parent=1 // pred_check
      _
    $region7: #{tpu_custom_call.1} parent=1 // pred_check_branch
      %31 = sbr.rel (0) target = $region9
    $region8: #{tpu_custom_call.1} parent=1 // pred_region
      _
    $region9: #{tpu_custom_call.1} parent=1 // pred_fallthru
      _
    // Predicated region
    $region10: #{tpu_custom_call.1} parent=1 // pred_check
      _
    $region11: #{tpu_custom_call.1} parent=1 // pred_check_branch
      %33 = sbr.rel (0) target = $region13
    $region12: #{tpu_custom_call.1} parent=1 // pred_region
      _
    $region13: #{tpu_custom_call.1} parent=1 // pred_fallthru
      _
    // Predicated region
    $region14: #{tpu_custom_call.1} parent=1 // pred_check
      _
    $region15: #{tpu_custom_call.1} parent=1 // pred_check_branch
      %35 = sbr.rel (0) target = $region17
    $region16: #{tpu_custom_call.1} parent=1 // pred_region
      %s37 = ssub.s32 2048, 2048
      %38 = vsyncadd [#allocation7], %s37
      %s39 = sshll.u32 [#allocation6], 4
      %s40 = int_to_ptr.vmem [resolvable:$true] %s39
      %45 = dma.hbm_to_vmem [thread:$0]  %s3, 2048, %s40, [#allocation7], 128, 128, 8
    $region17: #{tpu_custom_call.1} parent=1 // pred_fallthru
      _
    // Predicated region
    $region18: #{tpu_custom_call.1} parent=1 // pred_check
      _
    $region19: #{tpu_custom_call.1} parent=1 // pred_check_branch
      %47 = sbr.rel (0) target = $region21
    $region20: #{tpu_custom_call.1} parent=1 // pred_region
      _
    $region21: #{tpu_custom_call.1} parent=1 // pred_fallthru
      _
    // Predicated region
    $region22: #{tpu_custom_call.1} parent=1 // pred_check
      _
    $region23: #{tpu_custom_call.1} parent=1 // pred_check_branch
      %49 = sbr.rel (0) target = $region25
    $region24: #{tpu_custom_call.1} parent=1 // pred_region
      %s51 = ssub.s32 2048, 2048
      %52 = vsyncadd [#allocation7], %s51
      %s53 = sshll.u32 [#allocation8], 4
      %s54 = int_to_ptr.vmem [resolvable:$true] %s53
      %59 = dma.hbm_to_vmem [thread:$0]  %s5, 2048, %s54, [#allocation7], 128, 128, 8
    $region25: #{tpu_custom_call.1} parent=1 // pred_fallthru
      _
    // Predicated region
    $region26: #{tpu_custom_call.1} parent=1 // pred_check
      _
    $region27: #{tpu_custom_call.1} parent=1 // pred_check_branch
      %61 = sbr.rel (0) target = $region29
    $region28: #{tpu_custom_call.1} parent=1 // pred_region
      _
    $region29: #{tpu_custom_call.1} parent=1 // pred_fallthru
      _
    // Predicated region
    $region30: #{tpu_custom_call.1} parent=1 // pred_check
      _
    $region31: #{tpu_custom_call.1} parent=1 // pred_check_branch
      %63 = sbr.rel (0) target = $region33
    $region32: #{tpu_custom_call.1} parent=1 // pred_region
      %s65 = ssub.s32 4096, 4096
      %66 = vsyncadd [#allocation10], %s65
      %s67 = sshll.u32 [#allocation9], 4
      %s68 = int_to_ptr.vmem [resolvable:$true] %s67
      %73 = dma.hbm_to_vmem [thread:$0]  %s7, 4096, %s68, [#allocation10], 128, 128, 8
    $region33: #{tpu_custom_call.1} parent=1 // pred_fallthru
      _
    // Predicated region
    $region34: #{tpu_custom_call.1} parent=1 // pred_check
      _
    $region35: #{tpu_custom_call.1} parent=1 // pred_check_branch
      %75 = sbr.rel (0) target = $region37
    $region36: #{tpu_custom_call.1} parent=1 // pred_region
      _
    $region37: #{tpu_custom_call.1} parent=1 // pred_fallthru
      _
    // Predicated region
    $region38: #{tpu_custom_call.1} parent=1 // pred_check
      _
    $region39: #{tpu_custom_call.1} parent=1 // pred_check_branch
      %77 = sbr.rel (0) target = $region41
    $region40: #{tpu_custom_call.1} parent=1 // pred_region
      %78 = dma.done [#allocation4], 256
    $region41: #{tpu_custom_call.1} parent=1 // pred_fallthru
      _
    // Predicated region
    $region42: #{tpu_custom_call.1} parent=1 // pred_check
      _
    $region43: #{tpu_custom_call.1} parent=1 // pred_check_branch
      %80 = sbr.rel (0) target = $region45
    $region44: #{tpu_custom_call.1} parent=1 // pred_region
      %81 = dma.done [#allocation7], 2048
    $region45: #{tpu_custom_call.1} parent=1 // pred_fallthru
      _
    // Predicated region
    $region46: #{tpu_custom_call.1} parent=1 // pred_check
      _
    $region47: #{tpu_custom_call.1} parent=1 // pred_check_branch
      %83 = sbr.rel (0) target = $region49
    $region48: #{tpu_custom_call.1} parent=1 // pred_region
      %84 = dma.done [#allocation7], 2048
    $region49: #{tpu_custom_call.1} parent=1 // pred_fallthru
      _
    // Predicated region
    $region50: #{tpu_custom_call.1} parent=1 // pred_check
      _
    $region51: #{tpu_custom_call.1} parent=1 // pred_check_branch
      %86 = sbr.rel (0) target = $region53
    $region52: #{tpu_custom_call.1} parent=1 // pred_region
      %87 = dma.done [#allocation10], 4096
    $region53: #{tpu_custom_call.1} parent=1 // pred_fallthru
      _
    %p88 = scmp.eq.s32.totalorder 0, 0
    // Predicated region
    $region54: #{tpu_custom_call.1} parent=1 // pred_check
      %p89 = pneg %p88
    $region55: #{tpu_custom_call.1} parent=1 // pred_check_branch
      %91 = sbr.rel (%p89) target = $region57
    $region56: #{tpu_custom_call.1} parent=1 // pred_region
      %92 = vst [vmem:[#allocation2] sm:$0xff] 0.0
      %93 = vst [vmem:[#allocation2 + $0x8] sm:$0xff] 0.0
    $region57: #{tpu_custom_call.1} parent=1 // pred_fallthru
      _
    %v94 = vld [vmem:[#allocation2] sm:$0xff]
    %v95 = vld [vmem:[#allocation2 + $0x8] sm:$0xff]
    %v96 = vld [vmem:[%s2] sm:$0xf]
    %v97 = vld [vmem:[%s2 + $0x4] sm:$0xf]
    %v98 = vunpack.c.l.bf16 %v96
    %v99 = vunpack.c.l.bf16 %v97
    %v100 = vld [vmem:[%s1] sm:$0xff]
    %vm101 = vcmask 64512
    %v103 = vsel %vm101, %v98, 0
    %v106 = vsel %vm101, %v99, 0
    %108 = vmatprep.subr.mxu0 0.0
    %109 = vmatpush1.msra.mxu0 0.0
    %110 = vmatprep.subr.mxu0 0.0
    %111 = vmatpush1.msra.mxu0 0.0
    %112 = vmatprep.subr.mxu0 0.0
    %113 = vmatpush1.msra.mxu0 0.0
    %114 = vmatprep.subr.mxu0 0.0
    %115 = vmatpush1.msra.mxu0 0.0
    %116 = vmatprep.subr.mxu0 0.0
    %117 = vmatpush1.msra.mxu0 0.0
    %118 = vmatprep.subr.mxu0 0.0
    %119 = vmatpush1.msra.mxu0 0.0
    %120 = vmatprep.subr.mxu0 0.0
    %121 = vmatpush1.msra.mxu0 0.0
    %122 = vmatprep.subr.mxu0 0.0
    %123 = vmatpush1.msra.mxu0 0.0
    %124 = vmatprep.subr.mxu0 0.0
    %125 = vmatpush1.msra.mxu0 0.0
    %126 = vmatprep.subr.mxu0 0.0
    %127 = vmatpush1.msra.mxu0 0.0
    %128 = vmatprep.subr.mxu0 0.0
    %129 = vmatpush1.msra.mxu0 0.0
    %130 = vmatprep.subr.mxu0 0.0
    %131 = vmatpush1.msra.mxu0 0.0
    %132 = vmatprep.subr.mxu0 0.0
    %133 = vmatpush1.msra.mxu0 0.0
    %134 = vmatprep.subr.mxu0 0.0
    %135 = vmatpush1.msra.mxu0 0.0
    %136 = vmatprep.subr.mxu0 0.0
    %137 = vmatpush1.msra.mxu0 0.0
    %138 = vmatprep.subr.mxu0 0.0
    %139 = vmatpush1.msra.mxu0 %v100
    %140 = vmatprep.subr.mxu0 0.0
    %141 = vmatpush2.msra.mxu0 0.0
    %142 = vmatprep.subr.mxu0 0.0
    %143 = vmatpush2.msra.mxu0 0.0
    %144 = vmatprep.subr.mxu0 0.0
    %145 = vmatpush2.msra.mxu0 0.0
    %146 = vmatprep.subr.mxu0 0.0
    %147 = vmatpush2.msra.mxu0 0.0
    %148 = vmatprep.subr.mxu0 0.0
    %149 = vmatpush2.msra.mxu0 0.0
    %150 = vmatprep.subr.mxu0 0.0
    %151 = vmatpush2.msra.mxu0 0.0
    %152 = vmatprep.subr.mxu0 0.0
    %153 = vmatpush2.msra.mxu0 0.0
    %154 = vmatprep.subr.mxu0 0.0
    %155 = vmatpush2.msra.mxu0 0.0
    %156 = vmatprep.subr.mxu0 0.0
    %157 = vmatpush2.msra.mxu0 0.0
    %158 = vmatprep.subr.mxu0 0.0
    %159 = vmatpush2.msra.mxu0 0.0
    %160 = vmatprep.subr.mxu0 0.0
    %161 = vmatpush2.msra.mxu0 0.0
    %162 = vmatprep.subr.mxu0 0.0
    %163 = vmatpush2.msra.mxu0 0.0
    %164 = vmatprep.subr.mxu0 0.0
    %165 = vmatpush2.msra.mxu0 0.0
    %166 = vmatprep.subr.mxu0 0.0
    %167 = vmatpush2.msra.mxu0 0.0
    %168 = vmatprep.subr.mxu0 0.0
    %169 = vmatpush2.msra.mxu0 0.0
    %170 = vmatprep.subr.mxu0 0.0
    %171 = vmatpush2.msra.mxu0 0.0
    %172 = vmatprep.mubr.f32.mxu0 0.0
    %173 = vmatmul.mubr.f32.gmra.mxu0 %v103
    %v174 = vpop.f32.mrf.mxu0
    %v175 = vadd.f32 0.0, %v174
    %v176 = vpop.f32.mrf.mxu0
    %177 = vmatprep.mubr.f32.mxu0 0.0
    %178 = vmatmul.mubr.f32.gmra.mxu0 %v106
    %v179 = vpop.f32.mrf.mxu0
    %v180 = vadd.f32 0.0, %v179
    %v181 = vpop.f32.mrf.mxu0
    %182 = vdwg.mxu0
    %v183 = vadd.f32 %v94, %v175
    %v184 = vadd.f32 %v95, %v180
    %185 = vst [vmem:[#allocation2] sm:$0xff] %v183
    %186 = vst [vmem:[#allocation2 + $0x8] sm:$0xff] %v184
    // Predicated region
    $region58: #{tpu_custom_call.1} parent=1 // pred_check
      %p187 = pneg %p88
    $region59: #{tpu_custom_call.1} parent=1 // pred_check_branch
      %189 = sbr.rel (%p187) target = $region61
    $region60: #{tpu_custom_call.1} parent=1 // pred_region
      %v190 = vld [vmem:[#allocation2] sm:$0xff]
      %v191 = vld [vmem:[#allocation2 + $0x8] sm:$0xff]
      %v192 = vld [vmem:[#allocation6] sm:$0xff]
      %v193 = vld [vmem:[#allocation6 + $0x8] sm:$0xff]
      %v194 = vld [vmem:[#allocation6 + $0x10] sm:$0xff]
      %v195 = vld [vmem:[#allocation6 + $0x18] sm:$0xff]
      %v196 = vld [vmem:[#allocation6 + $0x20] sm:$0xff]
      %v197 = vld [vmem:[#allocation6 + $0x28] sm:$0xff]
      %v198 = vld [vmem:[#allocation6 + $0x30] sm:$0xff]
      %v199 = vld [vmem:[#allocation6 + $0x38] sm:$0xff]
      %v200 = vld [vmem:[#allocation6 + $0x40] sm:$0xff]
      %v201 = vld [vmem:[#allocation6 + $0x48] sm:$0xff]
      %v202 = vld [vmem:[#allocation6 + $0x50] sm:$0xff]
      %v203 = vld [vmem:[#allocation6 + $0x58] sm:$0xff]
      %v204 = vld [vmem:[#allocation6 + $0x60] sm:$0xff]
      %v205 = vld [vmem:[#allocation6 + $0x68] sm:$0xff]
      %v206 = vld [vmem:[#allocation6 + $0x70] sm:$0xff]
      %v207 = vld [vmem:[#allocation6 + $0x78] sm:$0xff]
      %v208 = vld [vmem:[%s4] sm:$0x1]
      %v210 = vlaneseq
      %v211 = vshrl.u32 %v210, 7
      %v212 = vsub.s32 0, %v211
      %v213 = vrot.slane %v208, %v212
      %215 = vmatprep.subr.mxu0 0.0
      %216 = vmatpush1.msra.mxu0 %v207
      %217 = vmatprep.subr.mxu0 0.0
      %218 = vmatpush1.msra.mxu0 %v206
      %219 = vmatprep.subr.mxu0 0.0
      %220 = vmatpush1.msra.mxu0 %v205
      %221 = vmatprep.subr.mxu0 0.0
      %222 = vmatpush1.msra.mxu0 %v204
      %223 = vmatprep.subr.mxu0 0.0
      %224 = vmatpush1.msra.mxu0 %v203
      %225 = vmatprep.subr.mxu0 0.0
      %226 = vmatpush1.msra.mxu0 %v202
      %227 = vmatprep.subr.mxu0 0.0
      %228 = vmatpush1.msra.mxu0 %v201
      %229 = vmatprep.subr.mxu0 0.0
      %230 = vmatpush1.msra.mxu0 %v200
      %231 = vmatprep.subr.mxu0 0.0
      %232 = vmatpush1.msra.mxu0 %v199
      %233 = vmatprep.subr.mxu0 0.0
      %234 = vmatpush1.msra.mxu0 %v198
      %235 = vmatprep.subr.mxu0 0.0
      %236 = vmatpush1.msra.mxu0 %v197
      %237 = vmatprep.subr.mxu0 0.0
      %238 = vmatpush1.msra.mxu0 %v196
      %239 = vmatprep.subr.mxu0 0.0
      %240 = vmatpush1.msra.mxu0 %v195
      %241 = vmatprep.subr.mxu0 0.0
      %242 = vmatpush1.msra.mxu0 %v194
      %243 = vmatprep.subr.mxu0 0.0
      %244 = vmatpush1.msra.mxu0 %v193
      %245 = vmatprep.subr.mxu0 0.0
      %246 = vmatpush1.msra.mxu0 %v192
      %247 = vmatprep.subr.mxu0 0.0
      %248 = vmatpush2.msra.mxu0 0.0
      %249 = vmatprep.subr.mxu0 0.0
      %250 = vmatpush2.msra.mxu0 0.0
      %251 = vmatprep.subr.mxu0 0.0
      %252 = vmatpush2.msra.mxu0 0.0
      %253 = vmatprep.subr.mxu0 0.0
      %254 = vmatpush2.msra.mxu0 0.0
      %255 = vmatprep.subr.mxu0 0.0
      %256 = vmatpush2.msra.mxu0 0.0
      %257 = vmatprep.subr.mxu0 0.0
      %258 = vmatpush2.msra.mxu0 0.0
      %259 = vmatprep.subr.mxu0 0.0
      %260 = vmatpush2.msra.mxu0 0.0
      %261 = vmatprep.subr.mxu0 0.0
      %262 = vmatpush2.msra.mxu0 0.0
      %263 = vmatprep.subr.mxu0 0.0
      %264 = vmatpush2.msra.mxu0 0.0
      %265 = vmatprep.subr.mxu0 0.0
      %266 = vmatpush2.msra.mxu0 0.0
      %267 = vmatprep.subr.mxu0 0.0
      %268 = vmatpush2.msra.mxu0 0.0
      %269 = vmatprep.subr.mxu0 0.0
      %270 = vmatpush2.msra.mxu0 0.0
      %271 = vmatprep.subr.mxu0 0.0
      %272 = vmatpush2.msra.mxu0 0.0
      %273 = vmatprep.subr.mxu0 0.0
      %274 = vmatpush2.msra.mxu0 0.0
      %275 = vmatprep.subr.mxu0 0.0
      %276 = vmatpush2.msra.mxu0 0.0
      %277 = vmatprep.subr.mxu0 0.0
      %278 = vmatpush2.msra.mxu0 0.0
      %279 = vmatprep.mubr.f32.mxu0 0.0
      %280 = vmatmul.mubr.f32.gmra.mxu0 %v190
      %v281 = vpop.f32.mrf.mxu0
      %v282 = vadd.f32 %v213, %v281
      %v283 = vpop.f32.mrf.mxu0
      %284 = vmatprep.mubr.f32.mxu0 0.0
      %285 = vmatmul.mubr.f32.gmra.mxu0 %v191
      %v286 = vpop.f32.mrf.mxu0
      %v287 = vadd.f32 %v213, %v286
      %v288 = vpop.f32.mrf.mxu0
      %289 = vdwg.mxu0
      %v290 = vmax.f32 %v282, 0.0
      %v291 = vmax.f32 %v287, 0.0
      %v292 = vld [vmem:[#allocation8] sm:$0xff]
      %v293 = vld [vmem:[#allocation8 + $0x8] sm:$0xff]
      %v294 = vld [vmem:[#allocation8 + $0x10] sm:$0xff]
      %v295 = vld [vmem:[#allocation8 + $0x18] sm:$0xff]
      %v296 = vld [vmem:[#allocation8 + $0x20] sm:$0xff]
      %v297 = vld [vmem:[#allocation8 + $0x28] sm:$0xff]
      %v298 = vld [vmem:[#allocation8 + $0x30] sm:$0xff]
      %v299 = vld [vmem:[#allocation8 + $0x38] sm:$0xff]
      %v300 = vld [vmem:[#allocation8 + $0x40] sm:$0xff]
      %v301 = vld [vmem:[#allocation8 + $0x48] sm:$0xff]
      %v302 = vld [vmem:[#allocation8 + $0x50] sm:$0xff]
      %v303 = vld [vmem:[#allocation8 + $0x58] sm:$0xff]
      %v304 = vld [vmem:[#allocation8 + $0x60] sm:$0xff]
      %v305 = vld [vmem:[#allocation8 + $0x68] sm:$0xff]
      %v306 = vld [vmem:[#allocation8 + $0x70] sm:$0xff]
      %v307 = vld [vmem:[#allocation8 + $0x78] sm:$0xff]
      %v308 = vld [vmem:[%s6] sm:$0x1]
      %v310 = vlaneseq
      %v311 = vshrl.u32 %v310, 7
      %v312 = vsub.s32 0, %v311
      %v313 = vrot.slane %v308, %v312
      %315 = vmatprep.subr.mxu0 0.0
      %316 = vmatpush1.msra.mxu0 %v307
      %317 = vmatprep.subr.mxu0 0.0
      %318 = vmatpush1.msra.mxu0 %v306
      %319 = vmatprep.subr.mxu0 0.0
      %320 = vmatpush1.msra.mxu0 %v305
      %321 = vmatprep.subr.mxu0 0.0
      %322 = vmatpush1.msra.mxu0 %v304
      %323 = vmatprep.subr.mxu0 0.0
      %324 = vmatpush1.msra.mxu0 %v303
      %325 = vmatprep.subr.mxu0 0.0
      %326 = vmatpush1.msra.mxu0 %v302
      %327 = vmatprep.subr.mxu0 0.0
      %328 = vmatpush1.msra.mxu0 %v301
      %329 = vmatprep.subr.mxu0 0.0
      %330 = vmatpush1.msra.mxu0 %v300
      %331 = vmatprep.subr.mxu0 0.0
      %332 = vmatpush1.msra.mxu0 %v299
      %333 = vmatprep.subr.mxu0 0.0
      %334 = vmatpush1.msra.mxu0 %v298
      %335 = vmatprep.subr.mxu0 0.0
      %336 = vmatpush1.msra.mxu0 %v297
      %337 = vmatprep.subr.mxu0 0.0
      %338 = vmatpush1.msra.mxu0 %v296
      %339 = vmatprep.subr.mxu0 0.0
      %340 = vmatpush1.msra.mxu0 %v295
      %341 = vmatprep.subr.mxu0 0.0
      %342 = vmatpush1.msra.mxu0 %v294
      %343 = vmatprep.subr.mxu0 0.0
      %344 = vmatpush1.msra.mxu0 %v293
      %345 = vmatprep.subr.mxu0 0.0
      %346 = vmatpush1.msra.mxu0 %v292
      %347 = vmatprep.subr.mxu0 0.0
      %348 = vmatpush2.msra.mxu0 0.0
      %349 = vmatprep.subr.mxu0 0.0
      %350 = vmatpush2.msra.mxu0 0.0
      %351 = vmatprep.subr.mxu0 0.0
      %352 = vmatpush2.msra.mxu0 0.0
      %353 = vmatprep.subr.mxu0 0.0
      %354 = vmatpush2.msra.mxu0 0.0
      %355 = vmatprep.subr.mxu0 0.0
      %356 = vmatpush2.msra.mxu0 0.0
      %357 = vmatprep.subr.mxu0 0.0
      %358 = vmatpush2.msra.mxu0 0.0
      %359 = vmatprep.subr.mxu0 0.0
      %360 = vmatpush2.msra.mxu0 0.0
      %361 = vmatprep.subr.mxu0 0.0
      %362 = vmatpush2.msra.mxu0 0.0
      %363 = vmatprep.subr.mxu0 0.0
      %364 = vmatpush2.msra.mxu0 0.0
      %365 = vmatprep.subr.mxu0 0.0
      %366 = vmatpush2.msra.mxu0 0.0
      %367 = vmatprep.subr.mxu0 0.0
      %368 = vmatpush2.msra.mxu0 0.0
      %369 = vmatprep.subr.mxu0 0.0
      %370 = vmatpush2.msra.mxu0 0.0
      %371 = vmatprep.subr.mxu0 0.0
      %372 = vmatpush2.msra.mxu0 0.0
      %373 = vmatprep.subr.mxu0 0.0
      %374 = vmatpush2.msra.mxu0 0.0
      %375 = vmatprep.subr.mxu0 0.0
      %376 = vmatpush2.msra.mxu0 0.0
      %377 = vmatprep.subr.mxu0 0.0
      %378 = vmatpush2.msra.mxu0 0.0
      %379 = vmatprep.mubr.f32.mxu0 0.0
      %380 = vmatmul.mubr.f32.gmra.mxu0 %v290
      %v381 = vpop.f32.mrf.mxu0
      %v382 = vadd.f32 %v313, %v381
      %v383 = vpop.f32.mrf.mxu0
      %384 = vmatprep.mubr.f32.mxu0 0.0
      %385 = vmatmul.mubr.f32.gmra.mxu0 %v291
      %v386 = vpop.f32.mrf.mxu0
      %v387 = vadd.f32 %v313, %v386
      %v388 = vpop.f32.mrf.mxu0
      %389 = vdwg.mxu0
      %v390 = vmax.f32 %v382, 0.0
      %v391 = vmax.f32 %v387, 0.0
      %v392 = vld [vmem:[#allocation3] sm:$0xff]
      %v393 = vld [vmem:[#allocation3 + $0x8] sm:$0xff]
      %v394 = vld [vmem:[#allocation9] sm:$0xff]
      %v395 = vld [vmem:[#allocation9 + $0x8] sm:$0xff]
      %v396 = vld [vmem:[#allocation9 + $0x10] sm:$0xff]
      %v397 = vld [vmem:[#allocation9 + $0x18] sm:$0xff]
      %v398 = vld [vmem:[#allocation9 + $0x20] sm:$0xff]
      %v399 = vld [vmem:[#allocation9 + $0x28] sm:$0xff]
      %v400 = vld [vmem:[#allocation9 + $0x30] sm:$0xff]
      %v401 = vld [vmem:[#allocation9 + $0x38] sm:$0xff]
      %v402 = vld [vmem:[#allocation9 + $0x40] sm:$0xff]
      %v403 = vld [vmem:[#allocation9 + $0x48] sm:$0xff]
      %v404 = vld [vmem:[#allocation9 + $0x50] sm:$0xff]
      %v405 = vld [vmem:[#allocation9 + $0x58] sm:$0xff]
      %v406 = vld [vmem:[#allocation9 + $0x60] sm:$0xff]
      %v407 = vld [vmem:[#allocation9 + $0x68] sm:$0xff]
      %v408 = vld [vmem:[#allocation9 + $0x70] sm:$0xff]
      %v409 = vld [vmem:[#allocation9 + $0x78] sm:$0xff]
      %v410 = vld [vmem:[#allocation9 + $0x80] sm:$0xff]
      %v411 = vld [vmem:[#allocation9 + $0x88] sm:$0xff]
      %v412 = vld [vmem:[#allocation9 + $0x90] sm:$0xff]
      %v413 = vld [vmem:[#allocation9 + $0x98] sm:$0xff]
      %v414 = vld [vmem:[#allocation9 + $0xa0] sm:$0xff]
      %v415 = vld [vmem:[#allocation9 + $0xa8] sm:$0xff]
      %v416 = vld [vmem:[#allocation9 + $0xb0] sm:$0xff]
      %v417 = vld [vmem:[#allocation9 + $0xb8] sm:$0xff]
      %v418 = vld [vmem:[#allocation9 + $0xc0] sm:$0xff]
      %v419 = vld [vmem:[#allocation9 + $0xc8] sm:$0xff]
      %v420 = vld [vmem:[#allocation9 + $0xd0] sm:$0xff]
      %v421 = vld [vmem:[#allocation9 + $0xd8] sm:$0xff]
      %v422 = vld [vmem:[#allocation9 + $0xe0] sm:$0xff]
      %v423 = vld [vmem:[#allocation9 + $0xe8] sm:$0xff]
      %v424 = vld [vmem:[#allocation9 + $0xf0] sm:$0xff]
      %v425 = vld [vmem:[#allocation9 + $0xf8] sm:$0xff]
      %v426 = vld [vmem:[%s8] sm:$0x1]
      %v428 = vlaneseq
      %v429 = vshrl.u32 %v428, 7
      %v430 = vsub.s32 0, %v429
      %v431 = vrot.slane %v426, %v430
      %433 = vmatprep.subr.mxu0 0.0
      %434 = vmatpush1.msra.mxu0 %v409
      %435 = vmatprep.subr.mxu0 0.0
      %436 = vmatpush1.msra.mxu0 %v408
      %437 = vmatprep.subr.mxu0 0.0
      %438 = vmatpush1.msra.mxu0 %v407
      %439 = vmatprep.subr.mxu0 0.0
      %440 = vmatpush1.msra.mxu0 %v406
      %441 = vmatprep.subr.mxu0 0.0
      %442 = vmatpush1.msra.mxu0 %v405
      %443 = vmatprep.subr.mxu0 0.0
      %444 = vmatpush1.msra.mxu0 %v404
      %445 = vmatprep.subr.mxu0 0.0
      %446 = vmatpush1.msra.mxu0 %v403
      %447 = vmatprep.subr.mxu0 0.0
      %448 = vmatpush1.msra.mxu0 %v402
      %449 = vmatprep.subr.mxu0 0.0
      %450 = vmatpush1.msra.mxu0 %v401
      %451 = vmatprep.subr.mxu0 0.0
      %452 = vmatpush1.msra.mxu0 %v400
      %453 = vmatprep.subr.mxu0 0.0
      %454 = vmatpush1.msra.mxu0 %v399
      %455 = vmatprep.subr.mxu0 0.0
      %456 = vmatpush1.msra.mxu0 %v398
      %457 = vmatprep.subr.mxu0 0.0
      %458 = vmatpush1.msra.mxu0 %v397
      %459 = vmatprep.subr.mxu0 0.0
      %460 = vmatpush1.msra.mxu0 %v396
      %461 = vmatprep.subr.mxu0 0.0
      %462 = vmatpush1.msra.mxu0 %v395
      %463 = vmatprep.subr.mxu0 0.0
      %464 = vmatpush1.msra.mxu0 %v394
      %465 = vmatprep.subr.mxu0 0.0
      %466 = vmatpush2.msra.mxu0 %v425
      %467 = vmatprep.subr.mxu0 0.0
      %468 = vmatpush2.msra.mxu0 %v424
      %469 = vmatprep.subr.mxu0 0.0
      %470 = vmatpush2.msra.mxu0 %v423
      %471 = vmatprep.subr.mxu0 0.0
      %472 = vmatpush2.msra.mxu0 %v422
      %473 = vmatprep.subr.mxu0 0.0
      %474 = vmatpush2.msra.mxu0 %v421
      %475 = vmatprep.subr.mxu0 0.0
      %476 = vmatpush2.msra.mxu0 %v420
      %477 = vmatprep.subr.mxu0 0.0
      %478 = vmatpush2.msra.mxu0 %v419
      %479 = vmatprep.subr.mxu0 0.0
      %480 = vmatpush2.msra.mxu0 %v418
      %481 = vmatprep.subr.mxu0 0.0
      %482 = vmatpush2.msra.mxu0 %v417
      %483 = vmatprep.subr.mxu0 0.0
      %484 = vmatpush2.msra.mxu0 %v416
      %485 = vmatprep.subr.mxu0 0.0
      %486 = vmatpush2.msra.mxu0 %v415
      %487 = vmatprep.subr.mxu0 0.0
      %488 = vmatpush2.msra.mxu0 %v414
      %489 = vmatprep.subr.mxu0 0.0
      %490 = vmatpush2.msra.mxu0 %v413
      %491 = vmatprep.subr.mxu0 0.0
      %492 = vmatpush2.msra.mxu0 %v412
      %493 = vmatprep.subr.mxu0 0.0
      %494 = vmatpush2.msra.mxu0 %v411
      %495 = vmatprep.subr.mxu0 0.0
      %496 = vmatpush2.msra.mxu0 %v410
      %497 = vmatprep.mubr.f32.mxu0 %v390
      %498 = vmatmul.mubr.f32.gmra.mxu0 %v392
      %v499 = vpop.f32.mrf.mxu0
      %v500 = vadd.f32 %v431, %v499
      %v501 = vpop.f32.mrf.mxu0
      %502 = vmatprep.mubr.f32.mxu0 %v391
      %503 = vmatmul.mubr.f32.gmra.mxu0 %v393
      %v504 = vpop.f32.mrf.mxu0
      %v505 = vadd.f32 %v431, %v504
      %v506 = vpop.f32.mrf.mxu0
      %507 = vdwg.mxu0
      %v508 = vmax.f32 %v500, 0.0
      %v509 = vmax.f32 %v505, 0.0
      %510 = vst [vmem:[#allocation11] sm:$0xff] %v508
      %511 = vst [vmem:[#allocation11 + $0x8] sm:$0xff] %v509
    $region61: #{tpu_custom_call.1} parent=1 // pred_fallthru
      _
    // Predicated region
    $region62: #{tpu_custom_call.1} parent=1 // pred_check
      _
    $region63: #{tpu_custom_call.1} parent=1 // pred_check_branch
      %513 = sbr.rel (0) target = $region65
    $region64: #{tpu_custom_call.1} parent=1 // pred_region
      %s515 = ssub.s32 256, 256
      %516 = vsyncadd [#allocation5], %s515
      %s517 = sshll.u32 [#allocation11], 4
      %s518 = int_to_ptr.vmem [resolvable:$true] %s517
      %523 = dma.vmem_to_hbm [thread:$0]  %s518, 256, %s9, [#allocation5], 128, 128, 8
    $region65: #{tpu_custom_call.1} parent=1 // pred_fallthru
      _
    // Predicated region
    $region66: #{tpu_custom_call.1} parent=1 // pred_check
      _
    $region67: #{tpu_custom_call.1} parent=1 // pred_check_branch
      %525 = sbr.rel (0) target = $region69
    $region68: #{tpu_custom_call.1} parent=1 // pred_region
      %526 = dma.done [#allocation5], 256
    $region69: #{tpu_custom_call.1} parent=1 // pred_fallthru
      _
    %527 = vsyncpa [#allocation4], 1
    %528 = vsyncpa [#allocation7], 1
    %529 = vsyncpa [#allocation10], 1
    %530 = vsyncpa [#allocation5], 1

</llo_original>
